<compile_context>
chip_gen: v6e
topology: v6e:2x2x1
jax: 0.10.0
libtpu: 0.0.40
codegen_flags: <defaults>
</compile_context>

<pallas_src>
import jax
import jax.numpy as jnp
from jax.experimental import pallas as pl
from jax.experimental.pallas import tpu as pltpu


def bert_cls_head_kernel(cls_ref, w1_ref, b1_ref, w2_ref, b2_ref, out_ref):
    """Classification head of BertClassificationModel_ori.

    cls_ref : (TB, H)      CLS hidden state tile (f32)
    w1_ref  : (H, H)       pre_fc weight, stored (in, out), compute dtype (bf16)
    b1_ref  : (1, H)       pre_fc bias (f32)
    w2_ref  : (H, C_pad)   fc weight, stored (in, out), lane-padded, bf16
    b2_ref  : (1, C_pad)   fc bias, lane-padded (f32)
    out_ref : (TB, C_pad)  logits (f32)
    """
    cls = cls_ref[...].astype(w1_ref.dtype)                      # (TB, H) bf16

    # fc_out = self.pre_fc(bert_cls_hidden_state)
    h = jnp.dot(cls, w1_ref[...],
                preferred_element_type=jnp.float32) + b1_ref[...]
    # fc_out = nn.ReLU()(fc_out)
    h = jnp.maximum(h, 0.0)
    # fc_out = self.dropout(fc_out)  -> identity in eval mode (p=0.1)
    # fc_out = self.fc(fc_out)
    logits = jnp.dot(h.astype(w2_ref.dtype), w2_ref[...],
                     preferred_element_type=jnp.float32) + b2_ref[...]
    out_ref[...] = logits.astype(out_ref.dtype)


def bert_classification_head(cls_hidden, w1, b1, w2, b2,
                             compute_dtype=jnp.bfloat16):
    """cls_hidden: (B, H) f32.  Weights stored transposed as (in, out)."""
    B, H = cls_hidden.shape
    C = w2.shape[1]

    # Pad batch to a multiple of 8 (full sublanes) and the logits lane dim to
    # a multiple of 128 (unmasked vst); slice the padding off afterwards.
    b_pad = pl.cdiv(B, 8) * 8
    c_pad = pl.cdiv(C, 128) * 128

    # Batch tiling: single block for small B, 128-row tiles for large B.
    if b_pad <= 128:
        tb = b_pad
    else:
        tb = 128
        b_pad = pl.cdiv(b_pad, 128) * 128

    cls_p = jnp.pad(cls_hidden, ((0, b_pad - B), (0, 0)))
    w2_p = jnp.pad(w2, ((0, 0), (0, c_pad - C))).astype(compute_dtype)
    b2_p = jnp.pad(b2, (0, c_pad - C)).reshape(1, c_pad).astype(jnp.float32)
    w1_c = w1.astype(compute_dtype)
    b1_r = b1.reshape(1, H).astype(jnp.float32)

    grid = (b_pad // tb,)

    out = pl.pallas_call(
        bert_cls_head_kernel,
        out_shape=jax.ShapeDtypeStruct((b_pad, c_pad), jnp.float32),
        grid=grid,
        in_specs=[
            pl.BlockSpec((tb, H), lambda i: (i, 0)),       # CLS tile per step
            pl.BlockSpec((H, H), lambda i: (0, 0)),        # w1 resident
            pl.BlockSpec((1, H), lambda i: (0, 0)),        # b1 resident
            pl.BlockSpec((H, c_pad), lambda i: (0, 0)),    # w2 resident
            pl.BlockSpec((1, c_pad), lambda i: (0, 0)),    # b2 resident
        ],
        out_specs=pl.BlockSpec((tb, c_pad), lambda i: (i, 0)),
        compiler_params=pltpu.CompilerParams(
            dimension_semantics=("parallel",)),
    )(cls_p, w1_c, b1_r, w2_p, b2_p)

    return out[:B, :C]


def synthetic_bert_backbone(input_ids, attention_mask, embedding_table):
    """Deterministic stand-in for the pretrained BERT encoder (full hidden).

    # TODO(synk): the pretrained `BertForSequenceClassification` encoder
    # (12-layer transformer with checkpoint weights) has no in-script Pallas
    # equivalent; we substitute an embedding lookup masked by attention_mask.
    """
    hidden = embedding_table[input_ids]                          # (B, S, H)
    hidden = hidden * attention_mask[..., None].astype(hidden.dtype)
    return hidden


def synthetic_bert_cls_hidden(input_ids, attention_mask, embedding_table):
    """CLS-only version of the synthetic backbone: gathers just row 0, so the
    full (B, S, H) hidden tensor is never materialized in HBM."""
    cls = embedding_table[input_ids[:, 0]]                       # (B, H)
    cls = cls * attention_mask[:, 0:1].astype(cls.dtype)
    return cls


def model_forward(input_ids, attention_mask, params, get_feature=False):
    cls_hidden = synthetic_bert_cls_hidden(
        input_ids, attention_mask, params["embedding"])
    if get_feature:
        return cls_hidden
    return bert_classification_head(
        cls_hidden,
        params["pre_fc_w"], params["pre_fc_b"],
        params["fc_w"], params["fc_b"],
    )


def init_params(key, vocab_size, hidden_size, class_num):
    k_emb, k_w1, k_b1, k_w2, k_b2 = jax.random.split(key, 5)
    scale = 1.0 / jnp.sqrt(hidden_size)
    return {
        "embedding": jax.random.normal(k_emb, (vocab_size, hidden_size),
                                       jnp.float32) * 0.02,
        # stored as (in, out)  <=>  PyTorch weight (out, in) transposed
        "pre_fc_w": jax.random.uniform(k_w1, (hidden_size, hidden_size),
                                       jnp.float32, -scale, scale),
        "pre_fc_b": jax.random.uniform(k_b1, (hidden_size,),
                                       jnp.float32, -scale, scale),
        "fc_w": jax.random.uniform(k_w2, (hidden_size, class_num),
                                   jnp.float32, -scale, scale),
        "fc_b": jax.random.uniform(k_b2, (class_num,),
                                   jnp.float32, -scale, scale),
    }


if __name__ == "__main__":
    B, S, H, C = 2, 8, 32, 2   # small shapes: batch=2, seq=8, hidden=32, classes=2
    VOCAB = 64

    key = jax.random.PRNGKey(0)
    k_params, k_ids, k_mask = jax.random.split(key, 3)

    params = init_params(k_params, VOCAB, H, C)
    input_ids = jax.random.randint(k_ids, (B, S), 0, VOCAB, jnp.int32)
    attention_mask = jnp.ones((B, S), jnp.int32)

    logits = model_forward(input_ids, attention_mask, params)
    logits = jax.block_until_ready(logits)

    # Pure-JAX reference: full synthetic backbone + CLS slice, same bf16
    # matmul / f32-accumulate semantics as the kernel.
    cd = jnp.bfloat16
    hidden_ref = synthetic_bert_backbone(input_ids, attention_mask,
                                         params["embedding"])
    cls_ref = hidden_ref[:, 0]                                   # (B, H)
    h_ref = jnp.dot(cls_ref.astype(cd), params["pre_fc_w"].astype(cd),
                    preferred_element_type=jnp.float32) + params["pre_fc_b"]
    h_ref = jnp.maximum(h_ref, 0.0)
    ref = jnp.dot(h_ref.astype(cd), params["fc_w"].astype(cd),
                  preferred_element_type=jnp.float32) + params["fc_b"]

    assert logits.shape == (B, C)
    assert jnp.allclose(logits, ref, atol=1e-3, rtol=1e-3), (logits, ref)

    # CLS-only backbone must match the full backbone's row 0.
    assert jnp.allclose(
        model_forward(input_ids, attention_mask, params, get_feature=True),
        cls_ref, atol=1e-6, rtol=1e-6)

    print("KERNEL_OK")
</pallas_src>

<mosaic_0001>
module attributes {stable_mosaic.version = 11 : i64} {
  func.func @bert_cls_head_kernel(%arg0: i32, %arg1: memref<8x32xf32, #tpu.memory_space<vmem>>, %arg2: memref<32x32xbf16, #tpu.memory_space<vmem>>, %arg3: memref<1x32xf32, #tpu.memory_space<vmem>>, %arg4: memref<32x128xbf16, #tpu.memory_space<vmem>>, %arg5: memref<1x128xf32, #tpu.memory_space<vmem>>, %arg6: memref<8x128xf32, #tpu.memory_space<vmem>>) attributes {dimension_semantics = [#tpu.dimension_semantics<parallel>], iteration_bounds = array<i64: 1>, scalar_prefetch = 0 : i64, scratch_operands = 0 : i64, tpu.core_type = #tpu.core_type<tc>, window_params = [{transform_indices = @transform_0, window_bounds = array<i64: 8, 32>}, {pipeline_mode = #tpu.pipeline_mode<synchronous>, transform_indices = @transform_1, window_bounds = array<i64: 32, 32>}, {pipeline_mode = #tpu.pipeline_mode<synchronous>, transform_indices = @transform_2, window_bounds = array<i64: 1, 32>}, {pipeline_mode = #tpu.pipeline_mode<synchronous>, transform_indices = @transform_3, window_bounds = array<i64: 32, 128>}, {pipeline_mode = #tpu.pipeline_mode<synchronous>, transform_indices = @transform_4, window_bounds = array<i64: 1, 128>}, {transform_indices = @transform_5, window_bounds = array<i64: 8, 128>}]} {
    %c0 = arith.constant 0 : index
    %c0_0 = arith.constant 0 : index
    %0 = vector.load %arg1[%c0, %c0_0] : memref<8x32xf32, #tpu.memory_space<vmem>>, vector<8x32xf32>
    %1 = arith.truncf %0 : vector<8x32xf32> to vector<8x32xbf16>
    %c0_1 = arith.constant 0 : index
    %c0_2 = arith.constant 0 : index
    %2 = vector.load %arg2[%c0_1, %c0_2] : memref<32x32xbf16, #tpu.memory_space<vmem>>, vector<32x32xbf16>
    %cst = arith.constant dense<0.000000e+00> : vector<8x32xf32>
    %3 = tpu.matmul %1, %2, %cst {dimension_numbers = #tpu.dot_dimension_numbers<[1], [0], [0], [1], [0, 0, 1, 1], [], []>} : vector<8x32xbf16>, vector<32x32xbf16>, vector<8x32xf32> -> vector<8x32xf32>
    %c0_3 = arith.constant 0 : index
    %c0_4 = arith.constant 0 : index
    %4 = vector.load %arg3[%c0_3, %c0_4] : memref<1x32xf32, #tpu.memory_space<vmem>>, vector<1x32xf32>
    %5 = vector.broadcast %4 : vector<1x32xf32> to vector<8x32xf32>
    %6 = arith.addf %3, %5 : vector<8x32xf32>
    %cst_5 = arith.constant 0.000000e+00 : f32
    %7 = vector.broadcast %cst_5 : f32 to vector<8x32xf32>
    %8 = arith.maximumf %6, %7 : vector<8x32xf32>
    %9 = arith.truncf %8 : vector<8x32xf32> to vector<8x32xbf16>
    %c0_6 = arith.constant 0 : index
    %c0_7 = arith.constant 0 : index
    %10 = vector.load %arg4[%c0_6, %c0_7] : memref<32x128xbf16, #tpu.memory_space<vmem>>, vector<32x128xbf16>
    %cst_8 = arith.constant dense<0.000000e+00> : vector<8x128xf32>
    %11 = tpu.matmul %9, %10, %cst_8 {dimension_numbers = #tpu.dot_dimension_numbers<[1], [0], [0], [1], [0, 0, 1, 1], [], []>} : vector<8x32xbf16>, vector<32x128xbf16>, vector<8x128xf32> -> vector<8x128xf32>
    %c0_9 = arith.constant 0 : index
    %c0_10 = arith.constant 0 : index
    %12 = vector.load %arg5[%c0_9, %c0_10] : memref<1x128xf32, #tpu.memory_space<vmem>>, vector<1x128xf32>
    %13 = vector.broadcast %12 : vector<1x128xf32> to vector<8x128xf32>
    %14 = arith.addf %11, %13 : vector<8x128xf32>
    %c0_11 = arith.constant 0 : index
    %c0_12 = arith.constant 0 : index
    %15 = vector.load %arg6[%c0_11, %c0_12] : memref<8x128xf32, #tpu.memory_space<vmem>>, vector<8x128xf32>
    tpu.vector_store %arg6[%c0_11, %c0_12], %14 {strides = array<i32>} : memref<8x128xf32, #tpu.memory_space<vmem>>, vector<8x128xf32>,
    return
  }
  func.func @transform_0(%arg0: i32) -> (i32, i32) {
    %c0_i32 = arith.constant 0 : i32
    %c0_i32_0 = arith.constant 0 : i32
    return %arg0, %c0_i32 : i32, i32
  }
  func.func @transform_1(%arg0: i32) -> (i32, i32) {
    %c0_i32 = arith.constant 0 : i32
    %c0_i32_0 = arith.constant 0 : i32
    %c0_i32_1 = arith.constant 0 : i32
    return %c0_i32, %c0_i32_0 : i32, i32
  }
  func.func @transform_2(%arg0: i32) -> (i32, i32) {
    %c0_i32 = arith.constant 0 : i32
    %c0_i32_0 = arith.constant 0 : i32
    %c0_i32_1 = arith.constant 0 : i32
    return %c0_i32, %c0_i32_0 : i32, i32
  }
  func.func @transform_3(%arg0: i32) -> (i32, i32) {
    %c0_i32 = arith.constant 0 : i32
    %c0_i32_0 = arith.constant 0 : i32
    %c0_i32_1 = arith.constant 0 : i32
    return %c0_i32, %c0_i32_0 : i32, i32
  }
  func.func @transform_4(%arg0: i32) -> (i32, i32) {
    %c0_i32 = arith.constant 0 : i32
    %c0_i32_0 = arith.constant 0 : i32
    %c0_i32_1 = arith.constant 0 : i32
    return %c0_i32, %c0_i32_0 : i32, i32
  }
  func.func @transform_5(%arg0: i32) -> (i32, i32) {
    %c0_i32 = arith.constant 0 : i32
    %c0_i32_0 = arith.constant 0 : i32
    return %arg0, %c0_i32 : i32, i32
  }
}

</mosaic_0001>

<llo_original>
// kernel: tpu_custom_call.1
$region0: #{tpu_custom_call.1}
  #allocation0 [shape = 'u32[]', space=smem, size = 0x4, offset = 0x4, fixed_abs, tag = 'smem constant byte address 0x4 - core index']
  #allocation1 [shape = 'u32[144,128]{1,0:T(1,128)}', space=vmem, size = 0x12000, scoped, tag = 'internal scratch']
  %s0 = inlined_call_operand.hbm [shape: f32[8,32], index: 0, kind: input, shape index: {}]
  %s1 = inlined_call_operand.hbm [shape: bf16[32,32], index: 1, kind: input, shape index: {}]
  %s2 = inlined_call_operand.vmem [shape: f32[1,32], index: 2, kind: input, shape index: {}]
  %s3 = inlined_call_operand.hbm [shape: bf16[32,128], index: 3, kind: input, shape index: {}]
  %s4 = inlined_call_operand.vmem [shape: f32[1,128], index: 4, kind: input, shape index: {}]
  %s5 = inlined_call_operand.hbm [shape: f32[8,128], index: 5, kind: output, shape index: {}]
  %s6 = sld [smem:[#allocation0]]
  $region42: #{tpu_custom_call.1} parent=0
    _
  %s8 = ssub.s32 1, %s6
  %s9 = scalar_select 0, %s8, %s6
  $region1: #{tpu_custom_call.1} parent=0
    #allocation2 [shape = 'u8[4096]{0}', space=vmem, size = 0x1000, scoped, tag = 'input window, operand 0, single buffered']
    #allocation3 [shape = 's32[1]{0}', space=sflag, size = 0x4, scoped, tag = 'scoped memory for tpu_custom_call.1']
    #allocation4 [shape = 's32[1]{0}', space=sflag, size = 0x4, scoped, tag = 'scoped memory for tpu_custom_call.1']
    #allocation5 [shape = 'u8[8192]{0}', space=vmem, size = 0x2000, scoped, tag = 'input window, operand 1, single buffered']
    #allocation6 [shape = 's32[1]{0}', space=sflag, size = 0x4, scoped, tag = 'scoped memory for tpu_custom_call.1']
    #allocation7 [shape = 'u8[8192]{0}', space=vmem, size = 0x2000, scoped, tag = 'input window, operand 3, single buffered']
    #allocation8 [shape = 'u8[4096]{0}', space=vmem, size = 0x1000, scoped, tag = 'output window, operand 0, single buffered']
    %10 = vsyncpa [#allocation3], 0
    %11 = vsyncpa [#allocation6], 0
    %12 = vsyncpa [#allocation4], 0
    // Predicated region
    $region2: #{tpu_custom_call.1} parent=1 // pred_check
      _
    $region3: #{tpu_custom_call.1} parent=1 // pred_check_branch
      %14 = sbr.rel (0) target = $region5
    $region4: #{tpu_custom_call.1} parent=1 // pred_region
      %s16 = ssub.s32 128, 128
      %17 = vsyncadd [#allocation3], %s16
      %s19 = sshll.u32 [#allocation2], 4
      %s20 = int_to_ptr.vmem [resolvable:$true] %s19
      %22 = dma.hbm_to_vmem [thread:$0]  %s0, 128, %s20, [#allocation3]
    $region5: #{tpu_custom_call.1} parent=1 // pred_fallthru
      _
    // Predicated region
    $region6: #{tpu_custom_call.1} parent=1 // pred_check
      _
    $region7: #{tpu_custom_call.1} parent=1 // pred_check_branch
      %24 = sbr.rel (0) target = $region9
    $region8: #{tpu_custom_call.1} parent=1 // pred_region
      %s26 = ssub.s32 256, 256
      %27 = vsyncadd [#allocation6], %s26
      %s28 = sshll.u32 [#allocation5], 4
      %s29 = int_to_ptr.vmem [resolvable:$true] %s28
      %34 = dma.hbm_to_vmem [thread:$0]  %s1, 256, %s29, [#allocation6], 64, 64, 4
    $region9: #{tpu_custom_call.1} parent=1 // pred_fallthru
      _
    // Predicated region
    $region10: #{tpu_custom_call.1} parent=1 // pred_check
      _
    $region11: #{tpu_custom_call.1} parent=1 // pred_check_branch
      %36 = sbr.rel (0) target = $region13
    $region12: #{tpu_custom_call.1} parent=1 // pred_region
      _
    $region13: #{tpu_custom_call.1} parent=1 // pred_fallthru
      _
    // Predicated region
    $region14: #{tpu_custom_call.1} parent=1 // pred_check
      _
    $region15: #{tpu_custom_call.1} parent=1 // pred_check_branch
      %38 = sbr.rel (0) target = $region17
    $region16: #{tpu_custom_call.1} parent=1 // pred_region
      %s40 = ssub.s32 256, 256
      %41 = vsyncadd [#allocation6], %s40
      %s42 = sshll.u32 [#allocation7], 4
      %s43 = int_to_ptr.vmem [resolvable:$true] %s42
      %48 = dma.hbm_to_vmem [thread:$0]  %s3, 256, %s43, [#allocation6], 64, 64, 4
    $region17: #{tpu_custom_call.1} parent=1 // pred_fallthru
      _
    // Predicated region
    $region18: #{tpu_custom_call.1} parent=1 // pred_check
      _
    $region19: #{tpu_custom_call.1} parent=1 // pred_check_branch
      %50 = sbr.rel (0) target = $region21
    $region20: #{tpu_custom_call.1} parent=1 // pred_region
      _
    $region21: #{tpu_custom_call.1} parent=1 // pred_fallthru
      _
    // Predicated region
    $region22: #{tpu_custom_call.1} parent=1 // pred_check
      _
    $region23: #{tpu_custom_call.1} parent=1 // pred_check_branch
      %52 = sbr.rel (0) target = $region25
    $region24: #{tpu_custom_call.1} parent=1 // pred_region
      %53 = dma.done [#allocation3], 128
    $region25: #{tpu_custom_call.1} parent=1 // pred_fallthru
      _
    // Predicated region
    $region26: #{tpu_custom_call.1} parent=1 // pred_check
      _
    $region27: #{tpu_custom_call.1} parent=1 // pred_check_branch
      %55 = sbr.rel (0) target = $region29
    $region28: #{tpu_custom_call.1} parent=1 // pred_region
      %56 = dma.done [#allocation6], 256
    $region29: #{tpu_custom_call.1} parent=1 // pred_fallthru
      _
    // Predicated region
    $region30: #{tpu_custom_call.1} parent=1 // pred_check
      _
    $region31: #{tpu_custom_call.1} parent=1 // pred_check_branch
      %58 = sbr.rel (0) target = $region33
    $region32: #{tpu_custom_call.1} parent=1 // pred_region
      %59 = dma.done [#allocation6], 256
    $region33: #{tpu_custom_call.1} parent=1 // pred_fallthru
      _
    %v61 = vld [vmem:[#allocation2] sm:$0xff]
    %v62 = vpack.c.bf16 %v61, %v61
    %v63 = vld [vmem:[#allocation5] sm:$0xf]
    %v64 = vld [vmem:[#allocation5 + $0x4] sm:$0xf]
    %v65 = vld [vmem:[#allocation5 + $0x8] sm:$0xf]
    %v66 = vld [vmem:[#allocation5 + $0xc] sm:$0xf]
    %v67 = vld [vmem:[%s2] sm:$0x1]
    %v69 = vlaneseq
    %v70 = vshrl.u32 %v69, 7
    %v71 = vsub.s32 0, %v70
    %v72 = vrot.slane %v67, %v71
    %v78 = vunpack.c.l.b16 %v63
    %v79 = vunpack.c.l.b16 %v64
    %v80 = vunpack.c.l.b16 %v65
    %v81 = vunpack.c.l.b16 %v66
    %v82 = vpack.c.b16 %v79, %v78
    %v83 = vpack.c.b16 %v81, %v80
    %vm86 = vcmask 261120
    %v88 = vsel %vm86, %v62, 0
    %90 = vmatprep.subr.bf16.mxu0 0
    %91 = vmatpush1.bf16.msra.mxu0 0
    %92 = vmatprep.subr.bf16.mxu0 0
    %93 = vmatpush1.bf16.msra.mxu0 0
    %94 = vmatprep.subr.bf16.mxu0 0
    %95 = vmatpush1.bf16.msra.mxu0 0
    %96 = vmatprep.subr.bf16.mxu0 0
    %97 = vmatpush1.bf16.msra.mxu0 0
    %98 = vmatprep.subr.bf16.mxu0 0
    %99 = vmatpush1.bf16.msra.mxu0 0
    %100 = vmatprep.subr.bf16.mxu0 0
    %101 = vmatpush1.bf16.msra.mxu0 0
    %102 = vmatprep.subr.bf16.mxu0 0
    %103 = vmatpush1.bf16.msra.mxu0 %v83
    %104 = vmatprep.subr.bf16.mxu0 0
    %105 = vmatpush1.bf16.msra.mxu0 %v82
    %106 = vmatprep.subr.bf16.mxu0 0
    %107 = vmatpush2.bf16.msra.mxu0 0
    %108 = vmatprep.subr.bf16.mxu0 0
    %109 = vmatpush2.bf16.msra.mxu0 0
    %110 = vmatprep.subr.bf16.mxu0 0
    %111 = vmatpush2.bf16.msra.mxu0 0
    %112 = vmatprep.subr.bf16.mxu0 0
    %113 = vmatpush2.bf16.msra.mxu0 0
    %114 = vmatprep.subr.bf16.mxu0 0
    %115 = vmatpush2.bf16.msra.mxu0 0
    %116 = vmatprep.subr.bf16.mxu0 0
    %117 = vmatpush2.bf16.msra.mxu0 0
    %118 = vmatprep.subr.bf16.mxu0 0
    %119 = vmatpush2.bf16.msra.mxu0 0
    %120 = vmatprep.subr.bf16.mxu0 0
    %121 = vmatpush2.bf16.msra.mxu0 0
    %122 = vmatprep.mubr.bf16.mxu0 0
    %123 = vmatmul.mubr.bf16.gmra.mxu0 %v88
    %v124 = vpop.f32.mrf.mxu0
    %v125 = vadd.f32 %v72, %v124
    %v126 = vpop.f32.mrf.mxu0
    %v127 = vpop.f32.mrf.mxu0
    %v128 = vpop.f32.mrf.mxu0
    %129 = vdwg.mxu0
    %v130 = vmax.f32 %v125, 0.0
    %v131 = vpack.c.bf16 %v130, %v130
    %v132 = vld [vmem:[#allocation7] sm:$0xf]
    %v133 = vld [vmem:[#allocation7 + $0x4] sm:$0xf]
    %v134 = vld [vmem:[#allocation7 + $0x8] sm:$0xf]
    %v135 = vld [vmem:[#allocation7 + $0xc] sm:$0xf]
    %v136 = vld [vmem:[%s4] sm:$0x1]
    %v138 = vlaneseq
    %v139 = vshrl.u32 %v138, 7
    %v140 = vsub.s32 0, %v139
    %v141 = vrot.slane %v136, %v140
    %v147 = vunpack.c.l.b16 %v132
    %v148 = vunpack.c.l.b16 %v133
    %v149 = vunpack.c.l.b16 %v134
    %v150 = vunpack.c.l.b16 %v135
    %v151 = vpack.c.b16 %v148, %v147
    %v152 = vpack.c.b16 %v150, %v149
    %v156 = vsel %vm86, %v131, 0
    %158 = vmatprep.subr.bf16.mxu0 0
    %159 = vmatpush1.bf16.msra.mxu0 0
    %160 = vmatprep.subr.bf16.mxu0 0
    %161 = vmatpush1.bf16.msra.mxu0 0
    %162 = vmatprep.subr.bf16.mxu0 0
    %163 = vmatpush1.bf16.msra.mxu0 0
    %164 = vmatprep.subr.bf16.mxu0 0
    %165 = vmatpush1.bf16.msra.mxu0 0
    %166 = vmatprep.subr.bf16.mxu0 0
    %167 = vmatpush1.bf16.msra.mxu0 0
    %168 = vmatprep.subr.bf16.mxu0 0
    %169 = vmatpush1.bf16.msra.mxu0 0
    %170 = vmatprep.subr.bf16.mxu0 0
    %171 = vmatpush1.bf16.msra.mxu0 %v152
    %172 = vmatprep.subr.bf16.mxu0 0
    %173 = vmatpush1.bf16.msra.mxu0 %v151
    %174 = vmatprep.subr.bf16.mxu0 0
    %175 = vmatpush2.bf16.msra.mxu0 0
    %176 = vmatprep.subr.bf16.mxu0 0
    %177 = vmatpush2.bf16.msra.mxu0 0
    %178 = vmatprep.subr.bf16.mxu0 0
    %179 = vmatpush2.bf16.msra.mxu0 0
    %180 = vmatprep.subr.bf16.mxu0 0
    %181 = vmatpush2.bf16.msra.mxu0 0
    %182 = vmatprep.subr.bf16.mxu0 0
    %183 = vmatpush2.bf16.msra.mxu0 0
    %184 = vmatprep.subr.bf16.mxu0 0
    %185 = vmatpush2.bf16.msra.mxu0 0
    %186 = vmatprep.subr.bf16.mxu0 0
    %187 = vmatpush2.bf16.msra.mxu0 0
    %188 = vmatprep.subr.bf16.mxu0 0
    %189 = vmatpush2.bf16.msra.mxu0 0
    %190 = vmatprep.mubr.bf16.mxu0 0
    %191 = vmatmul.mubr.bf16.gmra.mxu0 %v156
    %v192 = vpop.f32.mrf.mxu0
    %v193 = vadd.f32 %v141, %v192
    %v194 = vpop.f32.mrf.mxu0
    %v195 = vpop.f32.mrf.mxu0
    %v196 = vpop.f32.mrf.mxu0
    %197 = vdwg.mxu0
    %198 = vst [vmem:[#allocation8] sm:$0xff] %v193
    // Predicated region
    $region34: #{tpu_custom_call.1} parent=1 // pred_check
      _
    $region35: #{tpu_custom_call.1} parent=1 // pred_check_branch
      %200 = sbr.rel (0) target = $region37
    $region36: #{tpu_custom_call.1} parent=1 // pred_region
      %s202 = ssub.s32 128, 128
      %203 = vsyncadd [#allocation4], %s202
      %s205 = sshll.u32 [#allocation8], 4
      %s206 = int_to_ptr.vmem [resolvable:$true] %s205
      %208 = dma.vmem_to_hbm [thread:$0]  %s206, 128, %s5, [#allocation4]
    $region37: #{tpu_custom_call.1} parent=1 // pred_fallthru
      _
    // Predicated region
    $region38: #{tpu_custom_call.1} parent=1 // pred_check
      _
    $region39: #{tpu_custom_call.1} parent=1 // pred_check_branch
      %210 = sbr.rel (0) target = $region41
    $region40: #{tpu_custom_call.1} parent=1 // pred_region
      %211 = dma.done [#allocation4], 128
    $region41: #{tpu_custom_call.1} parent=1 // pred_fallthru
      _
    %212 = vsyncpa [#allocation3], 1
    %213 = vsyncpa [#allocation6], 1
    %214 = vsyncpa [#allocation4], 1

</llo_original>
